<compile_context>
chip_gen: v5e
topology: v5e:2x2
jax: 0.10.0
libtpu: 0.0.40
codegen_flags: <defaults>
</compile_context>

<pallas_src>
import jax
import jax.numpy as jnp
from jax.experimental import pallas as pl
from jax.experimental.pallas import tpu as pltpu

LANE = 128  # TPU lane width: pad all feature dims to this for lane-dense I/O


def itemgcn_kernel(x_ref, a_ref,
                   w1_ref, b1_ref, m1_ref,
                   w2_ref, b2_ref, m2_ref,
                   w3_ref, b3_ref, m3_ref,
                   o1_ref, o2_ref, o3_ref):
    """Fused 3-layer GCN: out_k = mask_k * relu(A @ (h_{k-1} @ W_k) + b_k)."""
    a = a_ref[...]                                   # [Np, Np] bf16 MXU operand

    def gcn_layer(h_bf16, w_ref, b_ref, m_ref, o_ref):
        # support = H @ W   (MXU: bf16 in, f32 accumulate)
        support = jnp.dot(h_bf16, w_ref[...],
                          preferred_element_type=jnp.float32)
        # propagate = A @ support   (MXU: bf16 in, f32 accumulate)
        h = jnp.dot(a, support.astype(jnp.bfloat16),
                    preferred_element_type=jnp.float32)
        h = h + b_ref[...]                           # f32 bias (VPU)
        h = jnp.maximum(h, jnp.float32(0.0))         # ReLU (VPU)
        h = h * m_ref[...]                           # inverted dropout {0, 1/0.7}
        o_ref[...] = h                               # lane-dense f32 store
        return h.astype(jnp.bfloat16)                # bf16 operand for next layer

    h1 = gcn_layer(x_ref[...], w1_ref, b1_ref, m1_ref, o1_ref)
    h2 = gcn_layer(h1, w2_ref, b2_ref, m2_ref, o2_ref)
    gcn_layer(h2, w3_ref, b3_ref, m3_ref, o3_ref)


def _pad2d(x, rows, cols):
    r, c = x.shape
    return jnp.pad(x, ((0, rows - r), (0, cols - c)))


def _dropout_masks(key, n_rows, p):
    """Three precomputed inverted-dropout scale masks of shape [n_rows, LANE]."""
    scale = jnp.float32(1.0 / (1.0 - p))
    ks = jax.random.split(key, 3)
    return tuple(
        (jax.random.uniform(k, (n_rows, LANE)) >= jnp.float32(p)).astype(jnp.float32)
        * scale
        for k in ks
    )


def item_gcn_forward(dropout_key, x, A, params, p=0.3):
    """ItemGCN.forward(x, A) -> (out1, out2, out3)."""
    (w1, b1), (w2, b2), (w3, b3) = params
    N, _ = x.shape
    H1, H2, H3 = w1.shape[1], w2.shape[1], w3.shape[1]

    # Pad rows to a sublane multiple and every feature dim to the lane width.
    Np = ((N + 7) // 8) * 8
    xp = _pad2d(x, Np, LANE).astype(jnp.bfloat16)
    Ap = _pad2d(A, Np, Np).astype(jnp.bfloat16)

    def pad_wb(w, b):
        return (_pad2d(w, LANE, LANE).astype(jnp.bfloat16),
                _pad2d(b.astype(jnp.float32), 1, LANE))

    w1p, b1p = pad_wb(w1, b1)
    w2p, b2p = pad_wb(w2, b2)
    w3p, b3p = pad_wb(w3, b3)

    m1, m2, m3 = _dropout_masks(dropout_key, Np, p)

    vmem = pl.BlockSpec(memory_space=pltpu.MemorySpace.VMEM)
    out_shape = tuple(jax.ShapeDtypeStruct((Np, LANE), jnp.float32)
                      for _ in range(3))

    # Advisory cost so XLA can schedule/overlap this latency-bound kernel.
    flops = 3 * (2 * Np * LANE * LANE + 2 * Np * Np * LANE)
    bytes_accessed = (xp.size * 2 + Ap.size * 2
                      + 3 * (LANE * LANE * 2 + LANE * 4)   # weights + biases
                      + 3 * (Np * LANE * 4)                # dropout masks
                      + 3 * (Np * LANE * 4))               # outputs
    cost = pl.CostEstimate(flops=flops, transcendentals=0,
                           bytes_accessed=bytes_accessed)

    o1, o2, o3 = pl.pallas_call(
        itemgcn_kernel,
        out_shape=out_shape,
        in_specs=[vmem] * 11,
        out_specs=(vmem, vmem, vmem),
        cost_estimate=cost,
    )(xp, Ap, w1p, b1p, m1, w2p, b2p, m2, w3p, b3p, m3)

    return o1[:N, :H1], o2[:N, :H2], o3[:N, :H3]


def glorot(key, shape):
    fan_in, fan_out = shape
    limit = jnp.sqrt(6.0 / (fan_in + fan_out))
    return jax.random.uniform(key, shape, jnp.float32, -limit, limit)


if __name__ == "__main__":
    # config: out_dim=32, gcn_hidden=32, gcn_hidden2=32, gcn_out=16, N=128 items
    N, D0, H1, H2, H3 = 128, 32, 32, 32, 16
    P_DROP = 0.3

    key = jax.random.PRNGKey(0)
    kx, ka, k1, k2, k3, kdrop = jax.random.split(key, 6)

    # node features
    x = jax.random.normal(kx, (N, D0), jnp.float32)

    # symmetric normalized adjacency with self-loops: D^{-1/2} (A+I) D^{-1/2}
    raw = (jax.random.uniform(ka, (N, N)) < 0.05).astype(jnp.float32)
    adj = jnp.clip(raw + raw.T, 0.0, 1.0) + jnp.eye(N, dtype=jnp.float32)
    deg_inv_sqrt = 1.0 / jnp.sqrt(adj.sum(axis=1))
    A = adj * deg_inv_sqrt[:, None] * deg_inv_sqrt[None, :]

    # GCNConv parameters (glorot weights, zero bias) — deterministic init
    params = (
        (glorot(k1, (D0, H1)), jnp.zeros((1, H1), jnp.float32)),
        (glorot(k2, (H1, H2)), jnp.zeros((1, H2), jnp.float32)),
        (glorot(k3, (H2, H3)), jnp.zeros((1, H3), jnp.float32)),
    )

    out1, out2, out3 = item_gcn_forward(kdrop, x, A, params, p=P_DROP)
    jax.block_until_ready((out1, out2, out3))

    assert out1.shape == (N, H1) and out2.shape == (N, H2) and out3.shape == (N, H3)

    # Pure-JAX f32 reference with the same dropout masks (loose tolerance:
    # kernel uses bf16 MXU operands).
    Np = ((N + 7) // 8) * 8
    m1, m2, m3 = _dropout_masks(kdrop, Np, P_DROP)
    (w1, b1), (w2, b2), (w3, b3) = params
    r1 = jnp.maximum(A @ (x @ w1) + b1, 0.0) * m1[:N, :H1]
    r2 = jnp.maximum(A @ (r1 @ w2) + b2, 0.0) * m2[:N, :H2]
    r3 = jnp.maximum(A @ (r2 @ w3) + b3, 0.0) * m3[:N, :H3]
    max_err = max(float(jnp.max(jnp.abs(out1 - r1))),
                  float(jnp.max(jnp.abs(out2 - r2))),
                  float(jnp.max(jnp.abs(out3 - r3))))
    assert max_err < 0.25, f"max abs error vs f32 reference too large: {max_err}"

    print("KERNEL_OK")
</pallas_src>

<mosaic_0001>
module attributes {stable_mosaic.version = 11 : i64} {
  func.func @itemgcn_kernel(%arg0: memref<128x128xbf16, #tpu.memory_space<vmem>>, %arg1: memref<128x128xbf16, #tpu.memory_space<vmem>>, %arg2: memref<128x128xbf16, #tpu.memory_space<vmem>>, %arg3: memref<1x128xf32, #tpu.memory_space<vmem>>, %arg4: memref<128x128xf32, #tpu.memory_space<vmem>>, %arg5: memref<128x128xbf16, #tpu.memory_space<vmem>>, %arg6: memref<1x128xf32, #tpu.memory_space<vmem>>, %arg7: memref<128x128xf32, #tpu.memory_space<vmem>>, %arg8: memref<128x128xbf16, #tpu.memory_space<vmem>>, %arg9: memref<1x128xf32, #tpu.memory_space<vmem>>, %arg10: memref<128x128xf32, #tpu.memory_space<vmem>>, %arg11: memref<128x128xf32, #tpu.memory_space<vmem>>, %arg12: memref<128x128xf32, #tpu.memory_space<vmem>>, %arg13: memref<128x128xf32, #tpu.memory_space<vmem>>) attributes {dimension_semantics = [], scalar_prefetch = 0 : i64, scratch_operands = 0 : i64, tpu.core_type = #tpu.core_type<tc>} {
    %c0 = arith.constant 0 : index
    %c0_0 = arith.constant 0 : index
    %0 = vector.load %arg1[%c0, %c0_0] : memref<128x128xbf16, #tpu.memory_space<vmem>>, vector<128x128xbf16>
    %c0_1 = arith.constant 0 : index
    %c0_2 = arith.constant 0 : index
    %1 = vector.load %arg0[%c0_1, %c0_2] : memref<128x128xbf16, #tpu.memory_space<vmem>>, vector<128x128xbf16>
    %c0_3 = arith.constant 0 : index
    %c0_4 = arith.constant 0 : index
    %2 = vector.load %arg2[%c0_3, %c0_4] : memref<128x128xbf16, #tpu.memory_space<vmem>>, vector<128x128xbf16>
    %cst = arith.constant dense<0.000000e+00> : vector<128x128xf32>
    %3 = tpu.matmul %1, %2, %cst {dimension_numbers = #tpu.dot_dimension_numbers<[1], [0], [0], [1], [0, 0, 1, 1], [], []>} : vector<128x128xbf16>, vector<128x128xbf16>, vector<128x128xf32> -> vector<128x128xf32>
    %4 = arith.truncf %3 : vector<128x128xf32> to vector<128x128xbf16>
    %cst_5 = arith.constant dense<0.000000e+00> : vector<128x128xf32>
    %5 = tpu.matmul %0, %4, %cst_5 {dimension_numbers = #tpu.dot_dimension_numbers<[1], [0], [0], [1], [0, 0, 1, 1], [], []>} : vector<128x128xbf16>, vector<128x128xbf16>, vector<128x128xf32> -> vector<128x128xf32>
    %c0_6 = arith.constant 0 : index
    %c0_7 = arith.constant 0 : index
    %6 = vector.load %arg3[%c0_6, %c0_7] : memref<1x128xf32, #tpu.memory_space<vmem>>, vector<1x128xf32>
    %7 = vector.broadcast %6 : vector<1x128xf32> to vector<128x128xf32>
    %8 = arith.addf %5, %7 : vector<128x128xf32>
    %cst_8 = arith.constant 0.000000e+00 : f32
    %9 = vector.broadcast %cst_8 : f32 to vector<128x128xf32>
    %10 = arith.maximumf %8, %9 : vector<128x128xf32>
    %c0_9 = arith.constant 0 : index
    %c0_10 = arith.constant 0 : index
    %11 = vector.load %arg4[%c0_9, %c0_10] : memref<128x128xf32, #tpu.memory_space<vmem>>, vector<128x128xf32>
    %12 = arith.mulf %10, %11 : vector<128x128xf32>
    %c0_11 = arith.constant 0 : index
    %c0_12 = arith.constant 0 : index
    %13 = vector.load %arg11[%c0_11, %c0_12] : memref<128x128xf32, #tpu.memory_space<vmem>>, vector<128x128xf32>
    tpu.vector_store %arg11[%c0_11, %c0_12], %12 {strides = array<i32>} : memref<128x128xf32, #tpu.memory_space<vmem>>, vector<128x128xf32>,
    %14 = arith.truncf %12 : vector<128x128xf32> to vector<128x128xbf16>
    %c0_13 = arith.constant 0 : index
    %c0_14 = arith.constant 0 : index
    %15 = vector.load %arg5[%c0_13, %c0_14] : memref<128x128xbf16, #tpu.memory_space<vmem>>, vector<128x128xbf16>
    %cst_15 = arith.constant dense<0.000000e+00> : vector<128x128xf32>
    %16 = tpu.matmul %14, %15, %cst_15 {dimension_numbers = #tpu.dot_dimension_numbers<[1], [0], [0], [1], [0, 0, 1, 1], [], []>} : vector<128x128xbf16>, vector<128x128xbf16>, vector<128x128xf32> -> vector<128x128xf32>
    %17 = arith.truncf %16 : vector<128x128xf32> to vector<128x128xbf16>
    %cst_16 = arith.constant dense<0.000000e+00> : vector<128x128xf32>
    %18 = tpu.matmul %0, %17, %cst_16 {dimension_numbers = #tpu.dot_dimension_numbers<[1], [0], [0], [1], [0, 0, 1, 1], [], []>} : vector<128x128xbf16>, vector<128x128xbf16>, vector<128x128xf32> -> vector<128x128xf32>
    %c0_17 = arith.constant 0 : index
    %c0_18 = arith.constant 0 : index
    %19 = vector.load %arg6[%c0_17, %c0_18] : memref<1x128xf32, #tpu.memory_space<vmem>>, vector<1x128xf32>
    %20 = vector.broadcast %19 : vector<1x128xf32> to vector<128x128xf32>
    %21 = arith.addf %18, %20 : vector<128x128xf32>
    %cst_19 = arith.constant 0.000000e+00 : f32
    %22 = vector.broadcast %cst_19 : f32 to vector<128x128xf32>
    %23 = arith.maximumf %21, %22 : vector<128x128xf32>
    %c0_20 = arith.constant 0 : index
    %c0_21 = arith.constant 0 : index
    %24 = vector.load %arg7[%c0_20, %c0_21] : memref<128x128xf32, #tpu.memory_space<vmem>>, vector<128x128xf32>
    %25 = arith.mulf %23, %24 : vector<128x128xf32>
    %c0_22 = arith.constant 0 : index
    %c0_23 = arith.constant 0 : index
    %26 = vector.load %arg12[%c0_22, %c0_23] : memref<128x128xf32, #tpu.memory_space<vmem>>, vector<128x128xf32>
    tpu.vector_store %arg12[%c0_22, %c0_23], %25 {strides = array<i32>} : memref<128x128xf32, #tpu.memory_space<vmem>>, vector<128x128xf32>,
    %27 = arith.truncf %25 : vector<128x128xf32> to vector<128x128xbf16>
    %c0_24 = arith.constant 0 : index
    %c0_25 = arith.constant 0 : index
    %28 = vector.load %arg8[%c0_24, %c0_25] : memref<128x128xbf16, #tpu.memory_space<vmem>>, vector<128x128xbf16>
    %cst_26 = arith.constant dense<0.000000e+00> : vector<128x128xf32>
    %29 = tpu.matmul %27, %28, %cst_26 {dimension_numbers = #tpu.dot_dimension_numbers<[1], [0], [0], [1], [0, 0, 1, 1], [], []>} : vector<128x128xbf16>, vector<128x128xbf16>, vector<128x128xf32> -> vector<128x128xf32>
    %30 = arith.truncf %29 : vector<128x128xf32> to vector<128x128xbf16>
    %cst_27 = arith.constant dense<0.000000e+00> : vector<128x128xf32>
    %31 = tpu.matmul %0, %30, %cst_27 {dimension_numbers = #tpu.dot_dimension_numbers<[1], [0], [0], [1], [0, 0, 1, 1], [], []>} : vector<128x128xbf16>, vector<128x128xbf16>, vector<128x128xf32> -> vector<128x128xf32>
    %c0_28 = arith.constant 0 : index
    %c0_29 = arith.constant 0 : index
    %32 = vector.load %arg9[%c0_28, %c0_29] : memref<1x128xf32, #tpu.memory_space<vmem>>, vector<1x128xf32>
    %33 = vector.broadcast %32 : vector<1x128xf32> to vector<128x128xf32>
    %34 = arith.addf %31, %33 : vector<128x128xf32>
    %cst_30 = arith.constant 0.000000e+00 : f32
    %35 = vector.broadcast %cst_30 : f32 to vector<128x128xf32>
    %36 = arith.maximumf %34, %35 : vector<128x128xf32>
    %c0_31 = arith.constant 0 : index
    %c0_32 = arith.constant 0 : index
    %37 = vector.load %arg10[%c0_31, %c0_32] : memref<128x128xf32, #tpu.memory_space<vmem>>, vector<128x128xf32>
    %38 = arith.mulf %36, %37 : vector<128x128xf32>
    %c0_33 = arith.constant 0 : index
    %c0_34 = arith.constant 0 : index
    %39 = vector.load %arg13[%c0_33, %c0_34] : memref<128x128xf32, #tpu.memory_space<vmem>>, vector<128x128xf32>
    tpu.vector_store %arg13[%c0_33, %c0_34], %38 {strides = array<i32>} : memref<128x128xf32, #tpu.memory_space<vmem>>, vector<128x128xf32>,
    return
  }
}

</mosaic_0001>

<llo_original>
// kernel: tpu_custom_call.1
$region0: #{tpu_custom_call.1}
  #allocation0 [shape = 'u32[]', space=smem, size = 0x4, offset = 0x4, fixed_abs, tag = 'smem constant byte address 0x4 - core index']
  #allocation1 [shape = 'u32[72,128]{1,0:T(1,128)}', space=vmem, size = 0x9000, scoped, tag = 'internal scratch']
  %s0 = inlined_call_operand.hbm [shape: bf16[128,128], index: 0, kind: input, shape index: {}]
  %s1 = inlined_call_operand.hbm [shape: bf16[128,128], index: 1, kind: input, shape index: {}]
  %s2 = inlined_call_operand.hbm [shape: bf16[128,128], index: 2, kind: input, shape index: {}]
  %s3 = inlined_call_operand.vmem [shape: f32[1,128], index: 3, kind: input, shape index: {}]
  %s4 = inlined_call_operand.hbm [shape: f32[128,128], index: 4, kind: input, shape index: {}]
  %s5 = inlined_call_operand.hbm [shape: bf16[128,128], index: 5, kind: input, shape index: {}]
  %s6 = inlined_call_operand.vmem [shape: f32[1,128], index: 6, kind: input, shape index: {}]
  %s7 = inlined_call_operand.hbm [shape: f32[128,128], index: 7, kind: input, shape index: {}]
  %s8 = inlined_call_operand.hbm [shape: bf16[128,128], index: 8, kind: input, shape index: {}]
  %s9 = inlined_call_operand.vmem [shape: f32[1,128], index: 9, kind: input, shape index: {}]
  %s10 = inlined_call_operand.hbm [shape: f32[128,128], index: 10, kind: input, shape index: {}]
  %s11 = inlined_call_operand.hbm [shape: f32[128,128], index: 11, kind: output, shape index: {0}]
  %s12 = inlined_call_operand.hbm [shape: f32[128,128], index: 12, kind: output, shape index: {1}]
  %s13 = inlined_call_operand.hbm [shape: f32[128,128], index: 13, kind: output, shape index: {2}]
  %14 = xla_tuple %s11, %s12, %s13
  %s15 = sld [smem:[#allocation0]]
  $region102: #{tpu_custom_call.1} parent=0
    _
  %s17 = ssub.s32 1, %s15
  %s18 = scalar_select 0, %s17, %s15
  $region1: #{tpu_custom_call.1} parent=0
    #allocation2 [shape = 'u8[32768]{0}', space=vmem, size = 0x8000, scoped, tag = 'input window, operand 0, single buffered']
    #allocation3 [shape = 's32[1]{0}', space=sflag, size = 0x4, scoped, tag = 'scoped memory for tpu_custom_call.1']
    #allocation4 [shape = 's32[1]{0}', space=sflag, size = 0x4, scoped, tag = 'scoped memory for tpu_custom_call.1']
    #allocation5 [shape = 'u8[32768]{0}', space=vmem, size = 0x8000, scoped, tag = 'input window, operand 1, single buffered']
    #allocation6 [shape = 's32[1]{0}', space=sflag, size = 0x4, scoped, tag = 'scoped memory for tpu_custom_call.1']
    #allocation7 [shape = 'u8[32768]{0}', space=vmem, size = 0x8000, scoped, tag = 'input window, operand 2, single buffered']
    #allocation8 [shape = 'u8[65536]{0}', space=vmem, size = 0x10000, scoped, tag = 'input window, operand 4, single buffered']
    #allocation9 [shape = 's32[1]{0}', space=sflag, size = 0x4, scoped, tag = 'scoped memory for tpu_custom_call.1']
    #allocation10 [shape = 'u8[32768]{0}', space=vmem, size = 0x8000, scoped, tag = 'input window, operand 5, single buffered']
    #allocation11 [shape = 'u8[65536]{0}', space=vmem, size = 0x10000, scoped, tag = 'input window, operand 7, single buffered']
    #allocation12 [shape = 's32[1]{0}', space=sflag, size = 0x4, scoped, tag = 'scoped memory for tpu_custom_call.1']
    #allocation13 [shape = 'u8[32768]{0}', space=vmem, size = 0x8000, scoped, tag = 'input window, operand 8, single buffered']
    #allocation14 [shape = 'u8[65536]{0}', space=vmem, size = 0x10000, scoped, tag = 'input window, operand 10, single buffered']
    #allocation15 [shape = 's32[1]{0}', space=sflag, size = 0x4, scoped, tag = 'scoped memory for tpu_custom_call.1']
    #allocation16 [shape = 'u8[65536]{0}', space=vmem, size = 0x10000, scoped, tag = 'output window, operand 0, single buffered']
    #allocation17 [shape = 'u8[65536]{0}', space=vmem, size = 0x10000, scoped, tag = 'output window, operand 1, single buffered']
    #allocation18 [shape = 's32[1]{0}', space=sflag, size = 0x4, scoped, tag = 'scoped memory for tpu_custom_call.1']
    #allocation19 [shape = 'u8[65536]{0}', space=vmem, size = 0x10000, scoped, tag = 'output window, operand 2, single buffered']
    %19 = vsyncpa [#allocation3], 0
    %20 = vsyncpa [#allocation6], 0
    %21 = vsyncpa [#allocation9], 0
    %22 = vsyncpa [#allocation12], 0
    %23 = vsyncpa [#allocation15], 0
    %24 = vsyncpa [#allocation4], 0
    %25 = vsyncpa [#allocation18], 0
    // Predicated region
    $region2: #{tpu_custom_call.1} parent=1 // pred_check
      _
    $region3: #{tpu_custom_call.1} parent=1 // pred_check_branch
      %27 = sbr.rel (0) target = $region5
    $region4: #{tpu_custom_call.1} parent=1 // pred_region
      %29 = vsyncadd [#allocation3], 0
      %s30 = sshll.u32 %s0, 4
      %s31 = int_to_ptr.hbm [resolvable:$true] %s30
      %s32 = sshll.u32 [#allocation2], 4
      %s33 = int_to_ptr.vmem [resolvable:$true] %s32
      %38 = dma.hbm_to_vmem [thread:$0]  %s31, 1024, %s33, [#allocation3], 64, 64, 4
    $region5: #{tpu_custom_call.1} parent=1 // pred_fallthru
      _
    // Predicated region
    $region6: #{tpu_custom_call.1} parent=1 // pred_check
      _
    $region7: #{tpu_custom_call.1} parent=1 // pred_check_branch
      %40 = sbr.rel (0) target = $region9
    $region8: #{tpu_custom_call.1} parent=1 // pred_region
      %42 = vsyncadd [#allocation6], 0
      %s43 = sshll.u32 %s1, 4
      %s44 = int_to_ptr.hbm [resolvable:$true] %s43
      %s45 = sshll.u32 [#allocation5], 4
      %s46 = int_to_ptr.vmem [resolvable:$true] %s45
      %51 = dma.hbm_to_vmem [thread:$0]  %s44, 1024, %s46, [#allocation6], 64, 64, 4
    $region9: #{tpu_custom_call.1} parent=1 // pred_fallthru
      _
    // Predicated region
    $region10: #{tpu_custom_call.1} parent=1 // pred_check
      _
    $region11: #{tpu_custom_call.1} parent=1 // pred_check_branch
      %53 = sbr.rel (0) target = $region13
    $region12: #{tpu_custom_call.1} parent=1 // pred_region
      %55 = vsyncadd [#allocation6], 0
      %s56 = sshll.u32 %s2, 4
      %s57 = int_to_ptr.hbm [resolvable:$true] %s56
      %s58 = sshll.u32 [#allocation7], 4
      %s59 = int_to_ptr.vmem [resolvable:$true] %s58
      %64 = dma.hbm_to_vmem [thread:$0]  %s57, 1024, %s59, [#allocation6], 64, 64, 4
    $region13: #{tpu_custom_call.1} parent=1 // pred_fallthru
      _
    // Predicated region
    $region14: #{tpu_custom_call.1} parent=1 // pred_check
      _
    $region15: #{tpu_custom_call.1} parent=1 // pred_check_branch
      %66 = sbr.rel (0) target = $region17
    $region16: #{tpu_custom_call.1} parent=1 // pred_region
      _
    $region17: #{tpu_custom_call.1} parent=1 // pred_fallthru
      _
    // Predicated region
    $region18: #{tpu_custom_call.1} parent=1 // pred_check
      _
    $region19: #{tpu_custom_call.1} parent=1 // pred_check_branch
      %68 = sbr.rel (0) target = $region21
    $region20: #{tpu_custom_call.1} parent=1 // pred_region
      %70 = vsyncadd [#allocation9], 0
      %s71 = sshll.u32 %s4, 4
      %s72 = int_to_ptr.hbm [resolvable:$true] %s71
      %s73 = sshll.u32 [#allocation8], 4
      %s74 = int_to_ptr.vmem [resolvable:$true] %s73
      %79 = dma.hbm_to_vmem [thread:$0]  %s72, 2048, %s74, [#allocation9], 128, 128, 8
    $region21: #{tpu_custom_call.1} parent=1 // pred_fallthru
      _
    // Predicated region
    $region22: #{tpu_custom_call.1} parent=1 // pred_check
      _
    $region23: #{tpu_custom_call.1} parent=1 // pred_check_branch
      %81 = sbr.rel (0) target = $region25
    $region24: #{tpu_custom_call.1} parent=1 // pred_region
      %83 = vsyncadd [#allocation9], 0
      %s84 = sshll.u32 %s5, 4
      %s85 = int_to_ptr.hbm [resolvable:$true] %s84
      %s86 = sshll.u32 [#allocation10], 4
      %s87 = int_to_ptr.vmem [resolvable:$true] %s86
      %92 = dma.hbm_to_vmem [thread:$0]  %s85, 1024, %s87, [#allocation9], 64, 64, 4
    $region25: #{tpu_custom_call.1} parent=1 // pred_fallthru
      _
    // Predicated region
    $region26: #{tpu_custom_call.1} parent=1 // pred_check
      _
    $region27: #{tpu_custom_call.1} parent=1 // pred_check_branch
      %94 = sbr.rel (0) target = $region29
    $region28: #{tpu_custom_call.1} parent=1 // pred_region
      _
    $region29: #{tpu_custom_call.1} parent=1 // pred_fallthru
      _
    // Predicated region
    $region30: #{tpu_custom_call.1} parent=1 // pred_check
      _
    $region31: #{tpu_custom_call.1} parent=1 // pred_check_branch
      %96 = sbr.rel (0) target = $region33
    $region32: #{tpu_custom_call.1} parent=1 // pred_region
      %98 = vsyncadd [#allocation12], 0
      %s99 = sshll.u32 %s7, 4
      %s100 = int_to_ptr.hbm [resolvable:$true] %s99
      %s101 = sshll.u32 [#allocation11], 4
      %s102 = int_to_ptr.vmem [resolvable:$true] %s101
      %107 = dma.hbm_to_vmem [thread:$0]  %s100, 2048, %s102, [#allocation12], 128, 128, 8
    $region33: #{tpu_custom_call.1} parent=1 // pred_fallthru
      _
    // Predicated region
    $region34: #{tpu_custom_call.1} parent=1 // pred_check
      _
    $region35: #{tpu_custom_call.1} parent=1 // pred_check_branch
      %109 = sbr.rel (0) target = $region37
    $region36: #{tpu_custom_call.1} parent=1 // pred_region
      %111 = vsyncadd [#allocation12], 0
      %s112 = sshll.u32 %s8, 4
      %s113 = int_to_ptr.hbm [resolvable:$true] %s112
      %s114 = sshll.u32 [#allocation13], 4
      %s115 = int_to_ptr.vmem [resolvable:$true] %s114
      %120 = dma.hbm_to_vmem [thread:$0]  %s113, 1024, %s115, [#allocation12], 64, 64, 4
    $region37: #{tpu_custom_call.1} parent=1 // pred_fallthru
      _
    // Predicated region
    $region38: #{tpu_custom_call.1} parent=1 // pred_check
      _
    $region39: #{tpu_custom_call.1} parent=1 // pred_check_branch
      %122 = sbr.rel (0) target = $region41
    $region40: #{tpu_custom_call.1} parent=1 // pred_region
      _
    $region41: #{tpu_custom_call.1} parent=1 // pred_fallthru
      _
    // Predicated region
    $region42: #{tpu_custom_call.1} parent=1 // pred_check
      _
    $region43: #{tpu_custom_call.1} parent=1 // pred_check_branch
      %124 = sbr.rel (0) target = $region45
    $region44: #{tpu_custom_call.1} parent=1 // pred_region
      %126 = vsyncadd [#allocation15], 0
      %s127 = sshll.u32 %s10, 4
      %s128 = int_to_ptr.hbm [resolvable:$true] %s127
      %s129 = sshll.u32 [#allocation14], 4
      %s130 = int_to_ptr.vmem [resolvable:$true] %s129
      %135 = dma.hbm_to_vmem [thread:$0]  %s128, 2048, %s130, [#allocation15], 128, 128, 8
    $region45: #{tpu_custom_call.1} parent=1 // pred_fallthru
      _
    // Predicated region
    $region46: #{tpu_custom_call.1} parent=1 // pred_check
      _
    $region47: #{tpu_custom_call.1} parent=1 // pred_check_branch
      %137 = sbr.rel (0) target = $region49
    $region48: #{tpu_custom_call.1} parent=1 // pred_region
      %139 = dma.done [#allocation3], 1024
    $region49: #{tpu_custom_call.1} parent=1 // pred_fallthru
      _
    // Predicated region
    $region50: #{tpu_custom_call.1} parent=1 // pred_check
      _
    $region51: #{tpu_custom_call.1} parent=1 // pred_check_branch
      %141 = sbr.rel (0) target = $region53
    $region52: #{tpu_custom_call.1} parent=1 // pred_region
      %143 = dma.done [#allocation6], 1024
    $region53: #{tpu_custom_call.1} parent=1 // pred_fallthru
      _
    // Predicated region
    $region54: #{tpu_custom_call.1} parent=1 // pred_check
      _
    $region55: #{tpu_custom_call.1} parent=1 // pred_check_branch
      %145 = sbr.rel (0) target = $region57
    $region56: #{tpu_custom_call.1} parent=1 // pred_region
      %147 = dma.done [#allocation6], 1024
    $region57: #{tpu_custom_call.1} parent=1 // pred_fallthru
      _
    // Predicated region
    $region58: #{tpu_custom_call.1} parent=1 // pred_check
      _
    $region59: #{tpu_custom_call.1} parent=1 // pred_check_branch
      %149 = sbr.rel (0) target = $region61
    $region60: #{tpu_custom_call.1} parent=1 // pred_region
      %151 = dma.done [#allocation9], 2048
    $region61: #{tpu_custom_call.1} parent=1 // pred_fallthru
      _
    // Predicated region
    $region62: #{tpu_custom_call.1} parent=1 // pred_check
      _
    $region63: #{tpu_custom_call.1} parent=1 // pred_check_branch
      %153 = sbr.rel (0) target = $region65
    $region64: #{tpu_custom_call.1} parent=1 // pred_region
      %155 = dma.done [#allocation9], 1024
    $region65: #{tpu_custom_call.1} parent=1 // pred_fallthru
      _
    // Predicated region
    $region66: #{tpu_custom_call.1} parent=1 // pred_check
      _
    $region67: #{tpu_custom_call.1} parent=1 // pred_check_branch
      %157 = sbr.rel (0) target = $region69
    $region68: #{tpu_custom_call.1} parent=1 // pred_region
      %159 = dma.done [#allocation12], 2048
    $region69: #{tpu_custom_call.1} parent=1 // pred_fallthru
      _
    // Predicated region
    $region70: #{tpu_custom_call.1} parent=1 // pred_check
      _
    $region71: #{tpu_custom_call.1} parent=1 // pred_check_branch
      %161 = sbr.rel (0) target = $region73
    $region72: #{tpu_custom_call.1} parent=1 // pred_region
      %163 = dma.done [#allocation12], 1024
    $region73: #{tpu_custom_call.1} parent=1 // pred_fallthru
      _
    // Predicated region
    $region74: #{tpu_custom_call.1} parent=1 // pred_check
      _
    $region75: #{tpu_custom_call.1} parent=1 // pred_check_branch
      %165 = sbr.rel (0) target = $region77
    $region76: #{tpu_custom_call.1} parent=1 // pred_region
      %167 = dma.done [#allocation15], 2048
    $region77: #{tpu_custom_call.1} parent=1 // pred_fallthru
      _
    %v168 = vld [vmem:[#allocation5] sm:$0xf]
    %v169 = vld [vmem:[#allocation5 + $0x4] sm:$0xf]
    %v170 = vld [vmem:[#allocation5 + $0x8] sm:$0xf]
    %v171 = vld [vmem:[#allocation5 + $0xc] sm:$0xf]
    %v172 = vld [vmem:[#allocation5 + $0x10] sm:$0xf]
    %v173 = vld [vmem:[#allocation5 + $0x14] sm:$0xf]
    %v174 = vld [vmem:[#allocation5 + $0x18] sm:$0xf]
    %v175 = vld [vmem:[#allocation5 + $0x1c] sm:$0xf]
    %v176 = vld [vmem:[#allocation5 + $0x20] sm:$0xf]
    %v177 = vld [vmem:[#allocation5 + $0x24] sm:$0xf]
    %v178 = vld [vmem:[#allocation5 + $0x28] sm:$0xf]
    %v179 = vld [vmem:[#allocation5 + $0x2c] sm:$0xf]
    %v180 = vld [vmem:[#allocation5 + $0x30] sm:$0xf]
    %v181 = vld [vmem:[#allocation5 + $0x34] sm:$0xf]
    %v182 = vld [vmem:[#allocation5 + $0x38] sm:$0xf]
    %v183 = vld [vmem:[#allocation5 + $0x3c] sm:$0xf]
    %v184 = vld [vmem:[#allocation2] sm:$0xf]
    %v185 = vld [vmem:[#allocation2 + $0x4] sm:$0xf]
    %v186 = vld [vmem:[#allocation2 + $0x8] sm:$0xf]
    %v187 = vld [vmem:[#allocation2 + $0xc] sm:$0xf]
    %v188 = vld [vmem:[#allocation2 + $0x10] sm:$0xf]
    %v189 = vld [vmem:[#allocation2 + $0x14] sm:$0xf]
    %v190 = vld [vmem:[#allocation2 + $0x18] sm:$0xf]
    %v191 = vld [vmem:[#allocation2 + $0x1c] sm:$0xf]
    %v192 = vld [vmem:[#allocation2 + $0x20] sm:$0xf]
    %v193 = vld [vmem:[#allocation2 + $0x24] sm:$0xf]
    %v194 = vld [vmem:[#allocation2 + $0x28] sm:$0xf]
    %v195 = vld [vmem:[#allocation2 + $0x2c] sm:$0xf]
    %v196 = vld [vmem:[#allocation2 + $0x30] sm:$0xf]
    %v197 = vld [vmem:[#allocation2 + $0x34] sm:$0xf]
    %v198 = vld [vmem:[#allocation2 + $0x38] sm:$0xf]
    %v199 = vld [vmem:[#allocation2 + $0x3c] sm:$0xf]
    %v200 = vld [vmem:[#allocation7] sm:$0xf]
    %v201 = vld [vmem:[#allocation7 + $0x4] sm:$0xf]
    %v202 = vld [vmem:[#allocation7 + $0x8] sm:$0xf]
    %v203 = vld [vmem:[#allocation7 + $0xc] sm:$0xf]
    %v204 = vld [vmem:[#allocation7 + $0x10] sm:$0xf]
    %v205 = vld [vmem:[#allocation7 + $0x14] sm:$0xf]
    %v206 = vld [vmem:[#allocation7 + $0x18] sm:$0xf]
    %v207 = vld [vmem:[#allocation7 + $0x1c] sm:$0xf]
    %v208 = vld [vmem:[#allocation7 + $0x20] sm:$0xf]
    %v209 = vld [vmem:[#allocation7 + $0x24] sm:$0xf]
    %v210 = vld [vmem:[#allocation7 + $0x28] sm:$0xf]
    %v211 = vld [vmem:[#allocation7 + $0x2c] sm:$0xf]
    %v212 = vld [vmem:[#allocation7 + $0x30] sm:$0xf]
    %v213 = vld [vmem:[#allocation7 + $0x34] sm:$0xf]
    %v214 = vld [vmem:[#allocation7 + $0x38] sm:$0xf]
    %v215 = vld [vmem:[#allocation7 + $0x3c] sm:$0xf]
    %v232 = vunpack.c.l.b16 %v184
    %v233 = vunpack.c.l.b16 %v185
    %v234 = vunpack.c.l.b16 %v186
    %v235 = vunpack.c.l.b16 %v187
    %v236 = vunpack.c.l.b16 %v188
    %v237 = vunpack.c.l.b16 %v189
    %v238 = vunpack.c.l.b16 %v190
    %v239 = vunpack.c.l.b16 %v191
    %v240 = vunpack.c.l.b16 %v192
    %v241 = vunpack.c.l.b16 %v193
    %v242 = vunpack.c.l.b16 %v194
    %v243 = vunpack.c.l.b16 %v195
    %v244 = vunpack.c.l.b16 %v196
    %v245 = vunpack.c.l.b16 %v197
    %v246 = vunpack.c.l.b16 %v198
    %v247 = vunpack.c.l.b16 %v199
    %v248 = vpack.c.b16 %v233, %v232
    %v249 = vpack.c.b16 %v235, %v234
    %v250 = vpack.c.b16 %v237, %v236
    %v251 = vpack.c.b16 %v239, %v238
    %v252 = vpack.c.b16 %v241, %v240
    %v253 = vpack.c.b16 %v243, %v242
    %v254 = vpack.c.b16 %v245, %v244
    %v255 = vpack.c.b16 %v247, %v246
    %v280 = vunpack.c.l.b16 %v200
    %v281 = vunpack.c.l.b16 %v201
    %v282 = vunpack.c.l.b16 %v202
    %v283 = vunpack.c.l.b16 %v203
    %v284 = vunpack.c.l.b16 %v204
    %v285 = vunpack.c.l.b16 %v205
    %v286 = vunpack.c.l.b16 %v206
    %v287 = vunpack.c.l.b16 %v207
    %v288 = vunpack.c.l.b16 %v208
    %v289 = vunpack.c.l.b16 %v209
    %v290 = vunpack.c.l.b16 %v210
    %v291 = vunpack.c.l.b16 %v211
    %v292 = vunpack.c.l.b16 %v212
    %v293 = vunpack.c.l.b16 %v213
    %v294 = vunpack.c.l.b16 %v214
    %v295 = vunpack.c.l.b16 %v215
    %v296 = vpack.c.b16 %v281, %v280
    %v297 = vpack.c.b16 %v283, %v282
    %v298 = vpack.c.b16 %v285, %v284
    %v299 = vpack.c.b16 %v287, %v286
    %v300 = vpack.c.b16 %v289, %v288
    %v301 = vpack.c.b16 %v291, %v290
    %v302 = vpack.c.b16 %v293, %v292
    %v303 = vpack.c.b16 %v295, %v294
    %312 = vmatpush.bf16.msra.mxu0 %v303
    %313 = vmatpush.bf16.msra.mxu0 %v302
    %314 = vmatpush.bf16.msra.mxu0 %v301
    %315 = vmatpush.bf16.msra.mxu0 %v300
    %316 = vmatpush.bf16.msra.mxu0 %v299
    %317 = vmatpush.bf16.msra.mxu0 %v298
    %318 = vmatpush.bf16.msra.mxu0 %v297
    %319 = vmatpush.bf16.msra.mxu0 %v296
    %320 = vmatmul.bf16.gmra.mxu0 %v248
    %v321 = vpop.f32.mrf.mxu0
    %v322 = vadd.f32 0.0, %v321
    %v323 = vpop.f32.mrf.mxu0
    %v324 = vadd.f32 0.0, %v323
    %325 = vmatmul.bf16.gmra.mxu0 %v249
    %v326 = vpop.f32.mrf.mxu0
    %v327 = vadd.f32 0.0, %v326
    %v328 = vpop.f32.mrf.mxu0
    %v329 = vadd.f32 0.0, %v328
    %330 = vmatmul.bf16.gmra.mxu0 %v250
    %v331 = vpop.f32.mrf.mxu0
    %v332 = vadd.f32 0.0, %v331
    %v333 = vpop.f32.mrf.mxu0
    %v334 = vadd.f32 0.0, %v333
    %335 = vmatmul.bf16.gmra.mxu0 %v251
    %v336 = vpop.f32.mrf.mxu0
    %v337 = vadd.f32 0.0, %v336
    %v338 = vpop.f32.mrf.mxu0
    %v339 = vadd.f32 0.0, %v338
    %340 = vmatmul.bf16.gmra.mxu0 %v252
    %v341 = vpop.f32.mrf.mxu0
    %v342 = vadd.f32 0.0, %v341
    %v343 = vpop.f32.mrf.mxu0
    %v344 = vadd.f32 0.0, %v343
    %345 = vmatmul.bf16.gmra.mxu0 %v253
    %v346 = vpop.f32.mrf.mxu0
    %v347 = vadd.f32 0.0, %v346
    %v348 = vpop.f32.mrf.mxu0
    %v349 = vadd.f32 0.0, %v348
    %350 = vmatmul.bf16.gmra.mxu0 %v254
    %v351 = vpop.f32.mrf.mxu0
    %v352 = vadd.f32 0.0, %v351
    %v353 = vpop.f32.mrf.mxu0
    %v354 = vadd.f32 0.0, %v353
    %355 = vmatmul.bf16.gmra.mxu0 %v255
    %v356 = vpop.f32.mrf.mxu0
    %v357 = vadd.f32 0.0, %v356
    %v358 = vpop.f32.mrf.mxu0
    %v359 = vadd.f32 0.0, %v358
    %360 = vdwg.mxu0
    %v361 = vpack.c.bf16 %v324, %v322
    %v362 = vpack.c.bf16 %v329, %v327
    %v363 = vpack.c.bf16 %v334, %v332
    %v364 = vpack.c.bf16 %v339, %v337
    %v365 = vpack.c.bf16 %v344, %v342
    %v366 = vpack.c.bf16 %v349, %v347
    %v367 = vpack.c.bf16 %v354, %v352
    %v368 = vpack.c.bf16 %v359, %v357
    %v369 = vld [vmem:[%s3] sm:$0x1]
    %v371 = vperm.slane %v369, 0
    %v389 = vunpack.c.l.b16 %v168
    %v390 = vunpack.c.l.b16 %v169
    %v391 = vunpack.c.l.b16 %v170
    %v392 = vunpack.c.l.b16 %v171
    %v393 = vunpack.c.l.b16 %v172
    %v394 = vunpack.c.l.b16 %v173
    %v395 = vunpack.c.l.b16 %v174
    %v396 = vunpack.c.l.b16 %v175
    %v397 = vunpack.c.l.b16 %v176
    %v398 = vunpack.c.l.b16 %v177
    %v399 = vunpack.c.l.b16 %v178
    %v400 = vunpack.c.l.b16 %v179
    %v401 = vunpack.c.l.b16 %v180
    %v402 = vunpack.c.l.b16 %v181
    %v403 = vunpack.c.l.b16 %v182
    %v404 = vunpack.c.l.b16 %v183
    %v405 = vpack.c.b16 %v390, %v389
    %v406 = vpack.c.b16 %v392, %v391
    %v407 = vpack.c.b16 %v394, %v393
    %v408 = vpack.c.b16 %v396, %v395
    %v409 = vpack.c.b16 %v398, %v397
    %v410 = vpack.c.b16 %v400, %v399
    %v411 = vpack.c.b16 %v402, %v401
    %v412 = vpack.c.b16 %v404, %v403
    %421 = vmatpush.bf16.msra.mxu0 %v368
    %422 = vmatpush.bf16.msra.mxu0 %v367
    %423 = vmatpush.bf16.msra.mxu0 %v366
    %424 = vmatpush.bf16.msra.mxu0 %v365
    %425 = vmatpush.bf16.msra.mxu0 %v364
    %426 = vmatpush.bf16.msra.mxu0 %v363
    %427 = vmatpush.bf16.msra.mxu0 %v362
    %428 = vmatpush.bf16.msra.mxu0 %v361
    %429 = vmatmul.bf16.gmra.mxu0 %v405
    %v430 = vpop.f32.mrf.mxu0
    %v431 = vadd.f32 %v371, %v430
    %v432 = vpop.f32.mrf.mxu0
    %v433 = vadd.f32 %v371, %v432
    %434 = vmatmul.bf16.gmra.mxu0 %v406
    %v435 = vpop.f32.mrf.mxu0
    %v436 = vadd.f32 %v371, %v435
    %v437 = vpop.f32.mrf.mxu0
    %v438 = vadd.f32 %v371, %v437
    %439 = vmatmul.bf16.gmra.mxu0 %v407
    %v440 = vpop.f32.mrf.mxu0
    %v441 = vadd.f32 %v371, %v440
    %v442 = vpop.f32.mrf.mxu0
    %v443 = vadd.f32 %v371, %v442
    %444 = vmatmul.bf16.gmra.mxu0 %v408
    %v445 = vpop.f32.mrf.mxu0
    %v446 = vadd.f32 %v371, %v445
    %v447 = vpop.f32.mrf.mxu0
    %v448 = vadd.f32 %v371, %v447
    %449 = vmatmul.bf16.gmra.mxu0 %v409
    %v450 = vpop.f32.mrf.mxu0
    %v451 = vadd.f32 %v371, %v450
    %v452 = vpop.f32.mrf.mxu0
    %v453 = vadd.f32 %v371, %v452
    %454 = vmatmul.bf16.gmra.mxu0 %v410
    %v455 = vpop.f32.mrf.mxu0
    %v456 = vadd.f32 %v371, %v455
    %v457 = vpop.f32.mrf.mxu0
    %v458 = vadd.f32 %v371, %v457
    %459 = vmatmul.bf16.gmra.mxu0 %v411
    %v460 = vpop.f32.mrf.mxu0
    %v461 = vadd.f32 %v371, %v460
    %v462 = vpop.f32.mrf.mxu0
    %v463 = vadd.f32 %v371, %v462
    %464 = vmatmul.bf16.gmra.mxu0 %v412
    %v465 = vpop.f32.mrf.mxu0
    %v466 = vadd.f32 %v371, %v465
    %v467 = vpop.f32.mrf.mxu0
    %v468 = vadd.f32 %v371, %v467
    %469 = vdwg.mxu0
    %v470 = vmax.f32 %v431, 0.0
    %v471 = vmax.f32 %v433, 0.0
    %v472 = vmax.f32 %v436, 0.0
    %v473 = vmax.f32 %v438, 0.0
    %v474 = vmax.f32 %v441, 0.0
    %v475 = vmax.f32 %v443, 0.0
    %v476 = vmax.f32 %v446, 0.0
    %v477 = vmax.f32 %v448, 0.0
    %v478 = vmax.f32 %v451, 0.0
    %v479 = vmax.f32 %v453, 0.0
    %v480 = vmax.f32 %v456, 0.0
    %v481 = vmax.f32 %v458, 0.0
    %v482 = vmax.f32 %v461, 0.0
    %v483 = vmax.f32 %v463, 0.0
    %v484 = vmax.f32 %v466, 0.0
    %v485 = vmax.f32 %v468, 0.0
    %v486 = vld [vmem:[#allocation8] sm:$0xff]
    %v487 = vld [vmem:[#allocation8 + $0x8] sm:$0xff]
    %v488 = vld [vmem:[#allocation8 + $0x10] sm:$0xff]
    %v489 = vld [vmem:[#allocation8 + $0x18] sm:$0xff]
    %v490 = vld [vmem:[#allocation8 + $0x20] sm:$0xff]
    %v491 = vld [vmem:[#allocation8 + $0x28] sm:$0xff]
    %v492 = vld [vmem:[#allocation8 + $0x30] sm:$0xff]
    %v493 = vld [vmem:[#allocation8 + $0x38] sm:$0xff]
    %v494 = vld [vmem:[#allocation8 + $0x40] sm:$0xff]
    %v495 = vld [vmem:[#allocation8 + $0x48] sm:$0xff]
    %v496 = vld [vmem:[#allocation8 + $0x50] sm:$0xff]
    %v497 = vld [vmem:[#allocation8 + $0x58] sm:$0xff]
    %v498 = vld [vmem:[#allocation8 + $0x60] sm:$0xff]
    %v499 = vld [vmem:[#allocation8 + $0x68] sm:$0xff]
    %v500 = vld [vmem:[#allocation8 + $0x70] sm:$0xff]
    %v501 = vld [vmem:[#allocation8 + $0x78] sm:$0xff]
    %v502 = vmul.f32 %v470, %v486
    %v503 = vmul.f32 %v471, %v487
    %v504 = vmul.f32 %v472, %v488
    %v505 = vmul.f32 %v473, %v489
    %v506 = vmul.f32 %v474, %v490
    %v507 = vmul.f32 %v475, %v491
    %v508 = vmul.f32 %v476, %v492
    %v509 = vmul.f32 %v477, %v493
    %v510 = vmul.f32 %v478, %v494
    %v511 = vmul.f32 %v479, %v495
    %v512 = vmul.f32 %v480, %v496
    %v513 = vmul.f32 %v481, %v497
    %v514 = vmul.f32 %v482, %v498
    %v515 = vmul.f32 %v483, %v499
    %v516 = vmul.f32 %v484, %v500
    %v517 = vmul.f32 %v485, %v501
    %518 = vst [vmem:[#allocation16] sm:$0xff] %v502
    %519 = vst [vmem:[#allocation16 + $0x8] sm:$0xff] %v503
    %520 = vst [vmem:[#allocation16 + $0x10] sm:$0xff] %v504
    %521 = vst [vmem:[#allocation16 + $0x18] sm:$0xff] %v505
    %522 = vst [vmem:[#allocation16 + $0x20] sm:$0xff] %v506
    %523 = vst [vmem:[#allocation16 + $0x28] sm:$0xff] %v507
    %524 = vst [vmem:[#allocation16 + $0x30] sm:$0xff] %v508
    %525 = vst [vmem:[#allocation16 + $0x38] sm:$0xff] %v509
    %526 = vst [vmem:[#allocation16 + $0x40] sm:$0xff] %v510
    %527 = vst [vmem:[#allocation16 + $0x48] sm:$0xff] %v511
    %528 = vst [vmem:[#allocation16 + $0x50] sm:$0xff] %v512
    %529 = vst [vmem:[#allocation16 + $0x58] sm:$0xff] %v513
    %530 = vst [vmem:[#allocation16 + $0x60] sm:$0xff] %v514
    %531 = vst [vmem:[#allocation16 + $0x68] sm:$0xff] %v515
    %532 = vst [vmem:[#allocation16 + $0x70] sm:$0xff] %v516
    %533 = vst [vmem:[#allocation16 + $0x78] sm:$0xff] %v517
    %v534 = vpack.c.bf16 %v503, %v502
    %v535 = vpack.c.bf16 %v505, %v504
    %v536 = vpack.c.bf16 %v507, %v506
    %v537 = vpack.c.bf16 %v509, %v508
    %v538 = vpack.c.bf16 %v511, %v510
    %v539 = vpack.c.bf16 %v513, %v512
    %v540 = vpack.c.bf16 %v515, %v514
    %v541 = vpack.c.bf16 %v517, %v516
    %v542 = vld [vmem:[#allocation10] sm:$0xf]
    %v543 = vld [vmem:[#allocation10 + $0x4] sm:$0xf]
    %v544 = vld [vmem:[#allocation10 + $0x8] sm:$0xf]
    %v545 = vld [vmem:[#allocation10 + $0xc] sm:$0xf]
    %v546 = vld [vmem:[#allocation10 + $0x10] sm:$0xf]
    %v547 = vld [vmem:[#allocation10 + $0x14] sm:$0xf]
    %v548 = vld [vmem:[#allocation10 + $0x18] sm:$0xf]
    %v549 = vld [vmem:[#allocation10 + $0x1c] sm:$0xf]
    %v550 = vld [vmem:[#allocation10 + $0x20] sm:$0xf]
    %v551 = vld [vmem:[#allocation10 + $0x24] sm:$0xf]
    %v552 = vld [vmem:[#allocation10 + $0x28] sm:$0xf]
    %v553 = vld [vmem:[#allocation10 + $0x2c] sm:$0xf]
    %v554 = vld [vmem:[#allocation10 + $0x30] sm:$0xf]
    %v555 = vld [vmem:[#allocation10 + $0x34] sm:$0xf]
    %v556 = vld [vmem:[#allocation10 + $0x38] sm:$0xf]
    %v557 = vld [vmem:[#allocation10 + $0x3c] sm:$0xf]
    %v574 = vunpack.c.l.b16 %v542
    %v575 = vunpack.c.l.b16 %v543
    %v576 = vunpack.c.l.b16 %v544
    %v577 = vunpack.c.l.b16 %v545
    %v578 = vunpack.c.l.b16 %v546
    %v579 = vunpack.c.l.b16 %v547
    %v580 = vunpack.c.l.b16 %v548
    %v581 = vunpack.c.l.b16 %v549
    %v582 = vunpack.c.l.b16 %v550
    %v583 = vunpack.c.l.b16 %v551
    %v584 = vunpack.c.l.b16 %v552
    %v585 = vunpack.c.l.b16 %v553
    %v586 = vunpack.c.l.b16 %v554
    %v587 = vunpack.c.l.b16 %v555
    %v588 = vunpack.c.l.b16 %v556
    %v589 = vunpack.c.l.b16 %v557
    %v590 = vpack.c.b16 %v575, %v574
    %v591 = vpack.c.b16 %v577, %v576
    %v592 = vpack.c.b16 %v579, %v578
    %v593 = vpack.c.b16 %v581, %v580
    %v594 = vpack.c.b16 %v583, %v582
    %v595 = vpack.c.b16 %v585, %v584
    %v596 = vpack.c.b16 %v587, %v586
    %v597 = vpack.c.b16 %v589, %v588
    %606 = vmatpush.bf16.msra.mxu0 %v597
    %607 = vmatpush.bf16.msra.mxu0 %v596
    %608 = vmatpush.bf16.msra.mxu0 %v595
    %609 = vmatpush.bf16.msra.mxu0 %v594
    %610 = vmatpush.bf16.msra.mxu0 %v593
    %611 = vmatpush.bf16.msra.mxu0 %v592
    %612 = vmatpush.bf16.msra.mxu0 %v591
    %613 = vmatpush.bf16.msra.mxu0 %v590
    %614 = vmatmul.bf16.gmra.mxu0 %v534
    %v615 = vpop.f32.mrf.mxu0
    %v616 = vadd.f32 0.0, %v615
    %v617 = vpop.f32.mrf.mxu0
    %v618 = vadd.f32 0.0, %v617
    %619 = vmatmul.bf16.gmra.mxu0 %v535
    %v620 = vpop.f32.mrf.mxu0
    %v621 = vadd.f32 0.0, %v620
    %v622 = vpop.f32.mrf.mxu0
    %v623 = vadd.f32 0.0, %v622
    %624 = vmatmul.bf16.gmra.mxu0 %v536
    %v625 = vpop.f32.mrf.mxu0
    %v626 = vadd.f32 0.0, %v625
    %v627 = vpop.f32.mrf.mxu0
    %v628 = vadd.f32 0.0, %v627
    %629 = vmatmul.bf16.gmra.mxu0 %v537
    %v630 = vpop.f32.mrf.mxu0
    %v631 = vadd.f32 0.0, %v630
    %v632 = vpop.f32.mrf.mxu0
    %v633 = vadd.f32 0.0, %v632
    %634 = vmatmul.bf16.gmra.mxu0 %v538
    %v635 = vpop.f32.mrf.mxu0
    %v636 = vadd.f32 0.0, %v635
    %v637 = vpop.f32.mrf.mxu0
    %v638 = vadd.f32 0.0, %v637
    %639 = vmatmul.bf16.gmra.mxu0 %v539
    %v640 = vpop.f32.mrf.mxu0
    %v641 = vadd.f32 0.0, %v640
    %v642 = vpop.f32.mrf.mxu0
    %v643 = vadd.f32 0.0, %v642
    %644 = vmatmul.bf16.gmra.mxu0 %v540
    %v645 = vpop.f32.mrf.mxu0
    %v646 = vadd.f32 0.0, %v645
    %v647 = vpop.f32.mrf.mxu0
    %v648 = vadd.f32 0.0, %v647
    %649 = vmatmul.bf16.gmra.mxu0 %v541
    %v650 = vpop.f32.mrf.mxu0
    %v651 = vadd.f32 0.0, %v650
    %v652 = vpop.f32.mrf.mxu0
    %v653 = vadd.f32 0.0, %v652
    %654 = vdwg.mxu0
    %v655 = vpack.c.bf16 %v618, %v616
    %v656 = vpack.c.bf16 %v623, %v621
    %v657 = vpack.c.bf16 %v628, %v626
    %v658 = vpack.c.bf16 %v633, %v631
    %v659 = vpack.c.bf16 %v638, %v636
    %v660 = vpack.c.bf16 %v643, %v641
    %v661 = vpack.c.bf16 %v648, %v646
    %v662 = vpack.c.bf16 %v653, %v651
    %v663 = vld [vmem:[%s6] sm:$0x1]
    %v665 = vperm.slane %v663, 0
    %667 = vmatpush.bf16.msra.mxu0 %v662
    %668 = vmatpush.bf16.msra.mxu0 %v661
    %669 = vmatpush.bf16.msra.mxu0 %v660
    %670 = vmatpush.bf16.msra.mxu0 %v659
    %671 = vmatpush.bf16.msra.mxu0 %v658
    %672 = vmatpush.bf16.msra.mxu0 %v657
    %673 = vmatpush.bf16.msra.mxu0 %v656
    %674 = vmatpush.bf16.msra.mxu0 %v655
    %675 = vmatmul.bf16.gmra.mxu0 %v405
    %v676 = vpop.f32.mrf.mxu0
    %v677 = vadd.f32 %v665, %v676
    %v678 = vpop.f32.mrf.mxu0
    %v679 = vadd.f32 %v665, %v678
    %680 = vmatmul.bf16.gmra.mxu0 %v406
    %v681 = vpop.f32.mrf.mxu0
    %v682 = vadd.f32 %v665, %v681
    %v683 = vpop.f32.mrf.mxu0
    %v684 = vadd.f32 %v665, %v683
    %685 = vmatmul.bf16.gmra.mxu0 %v407
    %v686 = vpop.f32.mrf.mxu0
    %v687 = vadd.f32 %v665, %v686
    %v688 = vpop.f32.mrf.mxu0
    %v689 = vadd.f32 %v665, %v688
    %690 = vmatmul.bf16.gmra.mxu0 %v408
    %v691 = vpop.f32.mrf.mxu0
    %v692 = vadd.f32 %v665, %v691
    %v693 = vpop.f32.mrf.mxu0
    %v694 = vadd.f32 %v665, %v693
    %695 = vmatmul.bf16.gmra.mxu0 %v409
    %v696 = vpop.f32.mrf.mxu0
    %v697 = vadd.f32 %v665, %v696
    %v698 = vpop.f32.mrf.mxu0
    %v699 = vadd.f32 %v665, %v698
    %700 = vmatmul.bf16.gmra.mxu0 %v410
    %v701 = vpop.f32.mrf.mxu0
    %v702 = vadd.f32 %v665, %v701
    %v703 = vpop.f32.mrf.mxu0
    %v704 = vadd.f32 %v665, %v703
    %705 = vmatmul.bf16.gmra.mxu0 %v411
    %v706 = vpop.f32.mrf.mxu0
    %v707 = vadd.f32 %v665, %v706
    %v708 = vpop.f32.mrf.mxu0
    %v709 = vadd.f32 %v665, %v708
    %710 = vmatmul.bf16.gmra.mxu0 %v412
    %v711 = vpop.f32.mrf.mxu0
    %v712 = vadd.f32 %v665, %v711
    %v713 = vpop.f32.mrf.mxu0
    %v714 = vadd.f32 %v665, %v713
    %715 = vdwg.mxu0
    %v716 = vmax.f32 %v677, 0.0
    %v717 = vmax.f32 %v679, 0.0
    %v718 = vmax.f32 %v682, 0.0
    %v719 = vmax.f32 %v684, 0.0
    %v720 = vmax.f32 %v687, 0.0
    %v721 = vmax.f32 %v689, 0.0
    %v722 = vmax.f32 %v692, 0.0
    %v723 = vmax.f32 %v694, 0.0
    %v724 = vmax.f32 %v697, 0.0
    %v725 = vmax.f32 %v699, 0.0
    %v726 = vmax.f32 %v702, 0.0
    %v727 = vmax.f32 %v704, 0.0
    %v728 = vmax.f32 %v707, 0.0
    %v729 = vmax.f32 %v709, 0.0
    %v730 = vmax.f32 %v712, 0.0
    %v731 = vmax.f32 %v714, 0.0
    %v732 = vld [vmem:[#allocation11] sm:$0xff]
    %v733 = vld [vmem:[#allocation11 + $0x8] sm:$0xff]
    %v734 = vld [vmem:[#allocation11 + $0x10] sm:$0xff]
    %v735 = vld [vmem:[#allocation11 + $0x18] sm:$0xff]
    %v736 = vld [vmem:[#allocation11 + $0x20] sm:$0xff]
    %v737 = vld [vmem:[#allocation11 + $0x28] sm:$0xff]
    %v738 = vld [vmem:[#allocation11 + $0x30] sm:$0xff]
    %v739 = vld [vmem:[#allocation11 + $0x38] sm:$0xff]
    %v740 = vld [vmem:[#allocation11 + $0x40] sm:$0xff]
    %v741 = vld [vmem:[#allocation11 + $0x48] sm:$0xff]
    %v742 = vld [vmem:[#allocation11 + $0x50] sm:$0xff]
    %v743 = vld [vmem:[#allocation11 + $0x58] sm:$0xff]
    %v744 = vld [vmem:[#allocation11 + $0x60] sm:$0xff]
    %v745 = vld [vmem:[#allocation11 + $0x68] sm:$0xff]
    %v746 = vld [vmem:[#allocation11 + $0x70] sm:$0xff]
    %v747 = vld [vmem:[#allocation11 + $0x78] sm:$0xff]
    %v748 = vmul.f32 %v716, %v732
    %v749 = vmul.f32 %v717, %v733
    %v750 = vmul.f32 %v718, %v734
    %v751 = vmul.f32 %v719, %v735
    %v752 = vmul.f32 %v720, %v736
    %v753 = vmul.f32 %v721, %v737
    %v754 = vmul.f32 %v722, %v738
    %v755 = vmul.f32 %v723, %v739
    %v756 = vmul.f32 %v724, %v740
    %v757 = vmul.f32 %v725, %v741
    %v758 = vmul.f32 %v726, %v742
    %v759 = vmul.f32 %v727, %v743
    %v760 = vmul.f32 %v728, %v744
    %v761 = vmul.f32 %v729, %v745
    %v762 = vmul.f32 %v730, %v746
    %v763 = vmul.f32 %v731, %v747
    %764 = vst [vmem:[#allocation17] sm:$0xff] %v748
    %765 = vst [vmem:[#allocation17 + $0x8] sm:$0xff] %v749
    %766 = vst [vmem:[#allocation17 + $0x10] sm:$0xff] %v750
    %767 = vst [vmem:[#allocation17 + $0x18] sm:$0xff] %v751
    %768 = vst [vmem:[#allocation17 + $0x20] sm:$0xff] %v752
    %769 = vst [vmem:[#allocation17 + $0x28] sm:$0xff] %v753
    %770 = vst [vmem:[#allocation17 + $0x30] sm:$0xff] %v754
    %771 = vst [vmem:[#allocation17 + $0x38] sm:$0xff] %v755
    %772 = vst [vmem:[#allocation17 + $0x40] sm:$0xff] %v756
    %773 = vst [vmem:[#allocation17 + $0x48] sm:$0xff] %v757
    %774 = vst [vmem:[#allocation17 + $0x50] sm:$0xff] %v758
    %775 = vst [vmem:[#allocation17 + $0x58] sm:$0xff] %v759
    %776 = vst [vmem:[#allocation17 + $0x60] sm:$0xff] %v760
    %777 = vst [vmem:[#allocation17 + $0x68] sm:$0xff] %v761
    %778 = vst [vmem:[#allocation17 + $0x70] sm:$0xff] %v762
    %779 = vst [vmem:[#allocation17 + $0x78] sm:$0xff] %v763
    %v780 = vpack.c.bf16 %v749, %v748
    %v781 = vpack.c.bf16 %v751, %v750
    %v782 = vpack.c.bf16 %v753, %v752
    %v783 = vpack.c.bf16 %v755, %v754
    %v784 = vpack.c.bf16 %v757, %v756
    %v785 = vpack.c.bf16 %v759, %v758
    %v786 = vpack.c.bf16 %v761, %v760
    %v787 = vpack.c.bf16 %v763, %v762
    %v788 = vld [vmem:[#allocation13] sm:$0xf]
    %v789 = vld [vmem:[#allocation13 + $0x4] sm:$0xf]
    %v790 = vld [vmem:[#allocation13 + $0x8] sm:$0xf]
    %v791 = vld [vmem:[#allocation13 + $0xc] sm:$0xf]
    %v792 = vld [vmem:[#allocation13 + $0x10] sm:$0xf]
    %v793 = vld [vmem:[#allocation13 + $0x14] sm:$0xf]
    %v794 = vld [vmem:[#allocation13 + $0x18] sm:$0xf]
    %v795 = vld [vmem:[#allocation13 + $0x1c] sm:$0xf]
    %v796 = vld [vmem:[#allocation13 + $0x20] sm:$0xf]
    %v797 = vld [vmem:[#allocation13 + $0x24] sm:$0xf]
    %v798 = vld [vmem:[#allocation13 + $0x28] sm:$0xf]
    %v799 = vld [vmem:[#allocation13 + $0x2c] sm:$0xf]
    %v800 = vld [vmem:[#allocation13 + $0x30] sm:$0xf]
    %v801 = vld [vmem:[#allocation13 + $0x34] sm:$0xf]
    %v802 = vld [vmem:[#allocation13 + $0x38] sm:$0xf]
    %v803 = vld [vmem:[#allocation13 + $0x3c] sm:$0xf]
    %v820 = vunpack.c.l.b16 %v788
    %v821 = vunpack.c.l.b16 %v789
    %v822 = vunpack.c.l.b16 %v790
    %v823 = vunpack.c.l.b16 %v791
    %v824 = vunpack.c.l.b16 %v792
    %v825 = vunpack.c.l.b16 %v793
    %v826 = vunpack.c.l.b16 %v794
    %v827 = vunpack.c.l.b16 %v795
    %v828 = vunpack.c.l.b16 %v796
    %v829 = vunpack.c.l.b16 %v797
    %v830 = vunpack.c.l.b16 %v798
    %v831 = vunpack.c.l.b16 %v799
    %v832 = vunpack.c.l.b16 %v800
    %v833 = vunpack.c.l.b16 %v801
    %v834 = vunpack.c.l.b16 %v802
    %v835 = vunpack.c.l.b16 %v803
    %v836 = vpack.c.b16 %v821, %v820
    %v837 = vpack.c.b16 %v823, %v822
    %v838 = vpack.c.b16 %v825, %v824
    %v839 = vpack.c.b16 %v827, %v826
    %v840 = vpack.c.b16 %v829, %v828
    %v841 = vpack.c.b16 %v831, %v830
    %v842 = vpack.c.b16 %v833, %v832
    %v843 = vpack.c.b16 %v835, %v834
    %852 = vmatpush.bf16.msra.mxu0 %v843
    %853 = vmatpush.bf16.msra.mxu0 %v842
    %854 = vmatpush.bf16.msra.mxu0 %v841
    %855 = vmatpush.bf16.msra.mxu0 %v840
    %856 = vmatpush.bf16.msra.mxu0 %v839
    %857 = vmatpush.bf16.msra.mxu0 %v838
    %858 = vmatpush.bf16.msra.mxu0 %v837
    %859 = vmatpush.bf16.msra.mxu0 %v836
    %860 = vmatmul.bf16.gmra.mxu0 %v780
    %v861 = vpop.f32.mrf.mxu0
    %v862 = vadd.f32 0.0, %v861
    %v863 = vpop.f32.mrf.mxu0
    %v864 = vadd.f32 0.0, %v863
    %865 = vmatmul.bf16.gmra.mxu0 %v781
    %v866 = vpop.f32.mrf.mxu0
    %v867 = vadd.f32 0.0, %v866
    %v868 = vpop.f32.mrf.mxu0
    %v869 = vadd.f32 0.0, %v868
    %870 = vmatmul.bf16.gmra.mxu0 %v782
    %v871 = vpop.f32.mrf.mxu0
    %v872 = vadd.f32 0.0, %v871
    %v873 = vpop.f32.mrf.mxu0
    %v874 = vadd.f32 0.0, %v873
    %875 = vmatmul.bf16.gmra.mxu0 %v783
    %v876 = vpop.f32.mrf.mxu0
    %v877 = vadd.f32 0.0, %v876
    %v878 = vpop.f32.mrf.mxu0
    %v879 = vadd.f32 0.0, %v878
    %880 = vmatmul.bf16.gmra.mxu0 %v784
    %v881 = vpop.f32.mrf.mxu0
    %v882 = vadd.f32 0.0, %v881
    %v883 = vpop.f32.mrf.mxu0
    %v884 = vadd.f32 0.0, %v883
    %885 = vmatmul.bf16.gmra.mxu0 %v785
    %v886 = vpop.f32.mrf.mxu0
    %v887 = vadd.f32 0.0, %v886
    %v888 = vpop.f32.mrf.mxu0
    %v889 = vadd.f32 0.0, %v888
    %890 = vmatmul.bf16.gmra.mxu0 %v786
    %v891 = vpop.f32.mrf.mxu0
    %v892 = vadd.f32 0.0, %v891
    %v893 = vpop.f32.mrf.mxu0
    %v894 = vadd.f32 0.0, %v893
    %895 = vmatmul.bf16.gmra.mxu0 %v787
    %v896 = vpop.f32.mrf.mxu0
    %v897 = vadd.f32 0.0, %v896
    %v898 = vpop.f32.mrf.mxu0
    %v899 = vadd.f32 0.0, %v898
    %900 = vdwg.mxu0
    %v901 = vpack.c.bf16 %v864, %v862
    %v902 = vpack.c.bf16 %v869, %v867
    %v903 = vpack.c.bf16 %v874, %v872
    %v904 = vpack.c.bf16 %v879, %v877
    %v905 = vpack.c.bf16 %v884, %v882
    %v906 = vpack.c.bf16 %v889, %v887
    %v907 = vpack.c.bf16 %v894, %v892
    %v908 = vpack.c.bf16 %v899, %v897
    %v909 = vld [vmem:[%s9] sm:$0x1]
    %v911 = vperm.slane %v909, 0
    %913 = vmatpush.bf16.msra.mxu0 %v908
    %914 = vmatpush.bf16.msra.mxu0 %v907
    %915 = vmatpush.bf16.msra.mxu0 %v906
    %916 = vmatpush.bf16.msra.mxu0 %v905
    %917 = vmatpush.bf16.msra.mxu0 %v904
    %918 = vmatpush.bf16.msra.mxu0 %v903
    %919 = vmatpush.bf16.msra.mxu0 %v902
    %920 = vmatpush.bf16.msra.mxu0 %v901
    %921 = vmatmul.bf16.gmra.mxu0 %v405
    %v922 = vpop.f32.mrf.mxu0
    %v923 = vadd.f32 %v911, %v922
    %v924 = vpop.f32.mrf.mxu0
    %v925 = vadd.f32 %v911, %v924
    %926 = vmatmul.bf16.gmra.mxu0 %v406
    %v927 = vpop.f32.mrf.mxu0
    %v928 = vadd.f32 %v911, %v927
    %v929 = vpop.f32.mrf.mxu0
    %v930 = vadd.f32 %v911, %v929
    %931 = vmatmul.bf16.gmra.mxu0 %v407
    %v932 = vpop.f32.mrf.mxu0
    %v933 = vadd.f32 %v911, %v932
    %v934 = vpop.f32.mrf.mxu0
    %v935 = vadd.f32 %v911, %v934
    %936 = vmatmul.bf16.gmra.mxu0 %v408
    %v937 = vpop.f32.mrf.mxu0
    %v938 = vadd.f32 %v911, %v937
    %v939 = vpop.f32.mrf.mxu0
    %v940 = vadd.f32 %v911, %v939
    %941 = vmatmul.bf16.gmra.mxu0 %v409
    %v942 = vpop.f32.mrf.mxu0
    %v943 = vadd.f32 %v911, %v942
    %v944 = vpop.f32.mrf.mxu0
    %v945 = vadd.f32 %v911, %v944
    %946 = vmatmul.bf16.gmra.mxu0 %v410
    %v947 = vpop.f32.mrf.mxu0
    %v948 = vadd.f32 %v911, %v947
    %v949 = vpop.f32.mrf.mxu0
    %v950 = vadd.f32 %v911, %v949
    %951 = vmatmul.bf16.gmra.mxu0 %v411
    %v952 = vpop.f32.mrf.mxu0
    %v953 = vadd.f32 %v911, %v952
    %v954 = vpop.f32.mrf.mxu0
    %v955 = vadd.f32 %v911, %v954
    %956 = vmatmul.bf16.gmra.mxu0 %v412
    %v957 = vpop.f32.mrf.mxu0
    %v958 = vadd.f32 %v911, %v957
    %v959 = vpop.f32.mrf.mxu0
    %v960 = vadd.f32 %v911, %v959
    %961 = vdwg.mxu0
    %v962 = vmax.f32 %v923, 0.0
    %v963 = vmax.f32 %v925, 0.0
    %v964 = vmax.f32 %v928, 0.0
    %v965 = vmax.f32 %v930, 0.0
    %v966 = vmax.f32 %v933, 0.0
    %v967 = vmax.f32 %v935, 0.0
    %v968 = vmax.f32 %v938, 0.0
    %v969 = vmax.f32 %v940, 0.0
    %v970 = vmax.f32 %v943, 0.0
    %v971 = vmax.f32 %v945, 0.0
    %v972 = vmax.f32 %v948, 0.0
    %v973 = vmax.f32 %v950, 0.0
    %v974 = vmax.f32 %v953, 0.0
    %v975 = vmax.f32 %v955, 0.0
    %v976 = vmax.f32 %v958, 0.0
    %v977 = vmax.f32 %v960, 0.0
    %v978 = vld [vmem:[#allocation14] sm:$0xff]
    %v979 = vld [vmem:[#allocation14 + $0x8] sm:$0xff]
    %v980 = vld [vmem:[#allocation14 + $0x10] sm:$0xff]
    %v981 = vld [vmem:[#allocation14 + $0x18] sm:$0xff]
    %v982 = vld [vmem:[#allocation14 + $0x20] sm:$0xff]
    %v983 = vld [vmem:[#allocation14 + $0x28] sm:$0xff]
    %v984 = vld [vmem:[#allocation14 + $0x30] sm:$0xff]
    %v985 = vld [vmem:[#allocation14 + $0x38] sm:$0xff]
    %v986 = vld [vmem:[#allocation14 + $0x40] sm:$0xff]
    %v987 = vld [vmem:[#allocation14 + $0x48] sm:$0xff]
    %v988 = vld [vmem:[#allocation14 + $0x50] sm:$0xff]
    %v989 = vld [vmem:[#allocation14 + $0x58] sm:$0xff]
    %v990 = vld [vmem:[#allocation14 + $0x60] sm:$0xff]
    %v991 = vld [vmem:[#allocation14 + $0x68] sm:$0xff]
    %v992 = vld [vmem:[#allocation14 + $0x70] sm:$0xff]
    %v993 = vld [vmem:[#allocation14 + $0x78] sm:$0xff]
    %v994 = vmul.f32 %v962, %v978
    %v995 = vmul.f32 %v963, %v979
    %v996 = vmul.f32 %v964, %v980
    %v997 = vmul.f32 %v965, %v981
    %v998 = vmul.f32 %v966, %v982
    %v999 = vmul.f32 %v967, %v983
    %v1000 = vmul.f32 %v968, %v984
    %v1001 = vmul.f32 %v969, %v985
    %v1002 = vmul.f32 %v970, %v986
    %v1003 = vmul.f32 %v971, %v987
    %v1004 = vmul.f32 %v972, %v988
    %v1005 = vmul.f32 %v973, %v989
    %v1006 = vmul.f32 %v974, %v990
    %v1007 = vmul.f32 %v975, %v991
    %v1008 = vmul.f32 %v976, %v992
    %v1009 = vmul.f32 %v977, %v993
    %1010 = vst [vmem:[#allocation19] sm:$0xff] %v994
    %1011 = vst [vmem:[#allocation19 + $0x8] sm:$0xff] %v995
    %1012 = vst [vmem:[#allocation19 + $0x10] sm:$0xff] %v996
    %1013 = vst [vmem:[#allocation19 + $0x18] sm:$0xff] %v997
    %1014 = vst [vmem:[#allocation19 + $0x20] sm:$0xff] %v998
    %1015 = vst [vmem:[#allocation19 + $0x28] sm:$0xff] %v999
    %1016 = vst [vmem:[#allocation19 + $0x30] sm:$0xff] %v1000
    %1017 = vst [vmem:[#allocation19 + $0x38] sm:$0xff] %v1001
    %1018 = vst [vmem:[#allocation19 + $0x40] sm:$0xff] %v1002
    %1019 = vst [vmem:[#allocation19 + $0x48] sm:$0xff] %v1003
    %1020 = vst [vmem:[#allocation19 + $0x50] sm:$0xff] %v1004
    %1021 = vst [vmem:[#allocation19 + $0x58] sm:$0xff] %v1005
    %1022 = vst [vmem:[#allocation19 + $0x60] sm:$0xff] %v1006
    %1023 = vst [vmem:[#allocation19 + $0x68] sm:$0xff] %v1007
    %1024 = vst [vmem:[#allocation19 + $0x70] sm:$0xff] %v1008
    %1025 = vst [vmem:[#allocation19 + $0x78] sm:$0xff] %v1009
    // Predicated region
    $region78: #{tpu_custom_call.1} parent=1 // pred_check
      _
    $region79: #{tpu_custom_call.1} parent=1 // pred_check_branch
      %1027 = sbr.rel (0) target = $region81
    $region80: #{tpu_custom_call.1} parent=1 // pred_region
      %1029 = vsyncadd [#allocation4], 0
      %s1030 = sshll.u32 [#allocation16], 4
      %s1031 = int_to_ptr.vmem [resolvable:$true] %s1030
      %s1032 = sshll.u32 %s11, 4
      %s1033 = int_to_ptr.hbm [resolvable:$true] %s1032
      %1038 = dma.vmem_to_hbm [thread:$0]  %s1031, 2048, %s1033, [#allocation4], 128, 128, 8
    $region81: #{tpu_custom_call.1} parent=1 // pred_fallthru
      _
    // Predicated region
    $region82: #{tpu_custom_call.1} parent=1 // pred_check
      _
    $region83: #{tpu_custom_call.1} parent=1 // pred_check_branch
      %1040 = sbr.rel (0) target = $region85
    $region84: #{tpu_custom_call.1} parent=1 // pred_region
      %1042 = vsyncadd [#allocation18], 0
      %s1043 = sshll.u32 [#allocation17], 4
      %s1044 = int_to_ptr.vmem [resolvable:$true] %s1043
      %s1045 = sshll.u32 %s12, 4
      %s1046 = int_to_ptr.hbm [resolvable:$true] %s1045
      %1051 = dma.vmem_to_hbm [thread:$0]  %s1044, 2048, %s1046, [#allocation18], 128, 128, 8
    $region85: #{tpu_custom_call.1} parent=1 // pred_fallthru
      _
    // Predicated region
    $region86: #{tpu_custom_call.1} parent=1 // pred_check
      _
    $region87: #{tpu_custom_call.1} parent=1 // pred_check_branch
      %1053 = sbr.rel (0) target = $region89
    $region88: #{tpu_custom_call.1} parent=1 // pred_region
      %1055 = vsyncadd [#allocation18], 0
      %s1056 = sshll.u32 [#allocation19], 4
      %s1057 = int_to_ptr.vmem [resolvable:$true] %s1056
      %s1058 = sshll.u32 %s13, 4
      %s1059 = int_to_ptr.hbm [resolvable:$true] %s1058
      %1064 = dma.vmem_to_hbm [thread:$0]  %s1057, 2048, %s1059, [#allocation18], 128, 128, 8
    $region89: #{tpu_custom_call.1} parent=1 // pred_fallthru
      _
    // Predicated region
    $region90: #{tpu_custom_call.1} parent=1 // pred_check
      _
    $region91: #{tpu_custom_call.1} parent=1 // pred_check_branch
      %1066 = sbr.rel (0) target = $region93
    $region92: #{tpu_custom_call.1} parent=1 // pred_region
      %1068 = dma.done [#allocation4], 2048
    $region93: #{tpu_custom_call.1} parent=1 // pred_fallthru
      _
    // Predicated region
    $region94: #{tpu_custom_call.1} parent=1 // pred_check
      _
    $region95: #{tpu_custom_call.1} parent=1 // pred_check_branch
      %1070 = sbr.rel (0) target = $region97
    $region96: #{tpu_custom_call.1} parent=1 // pred_region
      %1072 = dma.done [#allocation18], 2048
    $region97: #{tpu_custom_call.1} parent=1 // pred_fallthru
      _
    // Predicated region
    $region98: #{tpu_custom_call.1} parent=1 // pred_check
      _
    $region99: #{tpu_custom_call.1} parent=1 // pred_check_branch
      %1074 = sbr.rel (0) target = $region101
    $region100: #{tpu_custom_call.1} parent=1 // pred_region
      %1076 = dma.done [#allocation18], 2048
    $region101: #{tpu_custom_call.1} parent=1 // pred_fallthru
      _
    %1077 = vsyncpa [#allocation3], 1
    %1078 = vsyncpa [#allocation6], 1
    %1079 = vsyncpa [#allocation9], 1
    %1080 = vsyncpa [#allocation12], 1
    %1081 = vsyncpa [#allocation15], 1
    %1082 = vsyncpa [#allocation4], 1
    %1083 = vsyncpa [#allocation18], 1

</llo_original>
